<compile_context>
chip_gen: v7x
topology: tpu7x:2x2x1
jax: 0.10.0
libtpu: 0.0.40
codegen_flags: <defaults>
</compile_context>

<pallas_src>
import functools

import jax
import jax.numpy as jnp
from jax.experimental import pallas as pl
from jax.experimental.pallas import tpu as pltpu


# Sleep-stage transition matrix from the PyTorch module (rows sum to 1).
# Kept as Python constants so it folds into the kernel as immediates.
_TRANSITIONS = (
    (0.8, 0.2, 0.0, 0.0, 0.0),
    (0.1, 0.4, 0.4, 0.0, 0.1),
    (0.0, 0.1, 0.7, 0.2, 0.0),
    (0.0, 0.0, 0.3, 0.7, 0.0),
    (0.1, 0.2, 0.0, 0.0, 0.7),
)
SLEEP_STAGE_TRANSITIONS = jnp.array(_TRANSITIONS, dtype=jnp.float32)
_NUM_CLASSES = 5


def _round_up(x, m):
    return ((x + m - 1) // m) * m


def _tcl_kernel(logits_ref, out_ref, *, lambda_smooth, lambda_trans, batch):
    """One grid step = one (C, TB, S) tile of batch rows (classes leading).

    logits_ref: (C, TB, S) logits (original dtype; cast to f32 in-kernel)
    out_ref:    (1, 8, 128) f32 per-tile partial sum (lane-dense, unmasked store)
    """
    i = pl.program_id(0)
    C, TB, S = logits_ref.shape

    # Per-class (TB, S) slabs; all class reductions below are pure VPU combines.
    x = [logits_ref[c].astype(jnp.float32) for c in range(C)]

    # Numerically-stable softmax / log-softmax over the class (leading) axis.
    m = x[0]
    for c in range(1, C):
        m = jnp.maximum(m, x[c])
    shifted = [xc - m for xc in x]
    ex = [jnp.exp(s) for s in shifted]                   # C exps (EUP)
    sum_ex = ex[0]
    for c in range(1, C):
        sum_ex = sum_ex + ex[c]
    inv_sum = pl.reciprocal(sum_ex, approx=False)        # one divide per (b, t) row
    log_sum = jnp.log(sum_ex)                            # one log per (b, t) row
    probs = [e * inv_sum for e in ex]                    # softmax
    logp = [s - log_sum for s in shifted]                # log-softmax (no log(curr))

    # Consecutive-timestep pairs: prev = p[:, t-1], curr = p[:, t], t = 1..S-1.
    # TODO(synk): a pltpu.roll(+1) with a t==0 mask would avoid materializing the
    # off-by-one lane slices for very long sequences; slices are kept here since
    # they are cheap in this lane-dense layout and unambiguous for any S.
    prev = [p[:, : S - 1] for p in probs]
    lp_curr = [lp[:, 1:] for lp in logp]

    contrib = None
    for d in range(C):
        # Smoothness |p[t-1] - p[t]| for class d.
        term = lambda_smooth * jnp.abs(prev[d] - probs[d][:, 1:])
        # Transition: expected_d = sum_c T[c, d] * p[t-1, c]; zero entries skipped.
        # expected_d > 0 always (every column of T has a positive entry and
        # softmax probs are strictly positive), so no expected>0 select is needed.
        e_d = None
        for c in range(C):
            t_cd = _TRANSITIONS[c][d]
            if t_cd != 0.0:
                e_d = t_cd * prev[c] if e_d is None else e_d + t_cd * prev[c]
        term = term + lambda_trans * (e_d * (jnp.log(e_d) - lp_curr[d]))
        contrib = term if contrib is None else contrib + term

    # Mask batch rows past the true batch size (ragged last tile).
    b_idx = jax.lax.broadcasted_iota(jnp.int32, (TB, S - 1), 0) + i * TB
    contrib = jnp.where(b_idx < batch, contrib, 0.0)

    # Independent per-tile partial sum (lets the batch grid axis be "parallel");
    # broadcast into a full (8, 128) tile so the store is an unmasked lane-dense
    # vst.  Cross-tile reduce + normalization happen in XLA on a tiny array.
    partial = jnp.sum(contrib)
    out_ref[...] = jnp.full(out_ref.shape, partial, dtype=jnp.float32)


def _choose_tile_b(batch, seq, n_cls, itemsize):
    """Batch-tile size computed from *padded on-chip* bytes per batch row."""
    pad_s = _round_up(seq, 128)
    # double-buffered input block + ~6 live f32 slab-sets of intermediates / class
    per_row = 2 * n_cls * pad_s * itemsize + 6 * n_cls * pad_s * 4
    budget = 8 << 20              # conservative working set: fits v7x's 64 MiB VMEM
    max_rows = max(8, (budget // per_row) // 8 * 8)
    # prefer >= ~8 grid steps so the DMA pipeline has depth and v7x "parallel"
    # sharding has tiles to split across its two TensorCores.
    target_rows = max(8, _round_up(-(-batch // 8), 8))
    tile_b = min(max_rows, target_rows)
    if tile_b >= batch:
        tile_b = batch            # full batch dim is always a legal block shape
    return tile_b


@functools.partial(jax.jit,
                   static_argnames=("tile_b", "lambda_smooth", "lambda_trans"))
def _tcl_pallas(logits, *, tile_b, lambda_smooth, lambda_trans):
    B, S, C = logits.shape
    num_tiles = pl.cdiv(B, tile_b)

    # Lane-dense layout: sequence on the 128-lane axis, classes as the leading
    # dim (original dtype; the f32 cast happens on the VMEM tile in-kernel).
    x_cbs = jnp.transpose(logits, (2, 0, 1))             # [C, B, S]

    kernel = functools.partial(_tcl_kernel,
                               lambda_smooth=lambda_smooth,
                               lambda_trans=lambda_trans,
                               batch=B)

    # VMEM accounting with the padded on-chip layout (not logical bytes).
    pad_b = _round_up(tile_b, 8)
    pad_s = _round_up(S, 128)
    tile_bytes = 2 * C * pad_b * pad_s * logits.dtype.itemsize    # dbl-buffered in
    tile_bytes += 6 * C * pad_b * pad_s * 4                       # f32 intermediates
    vmem_limit = min(64 << 20, max(32 << 20, int(1.25 * tile_bytes)))

    cost = pl.CostEstimate(
        flops=B * S * C * 24,
        transcendentals=B * S * (2 * C + 1),
        bytes_accessed=B * S * C * logits.dtype.itemsize + num_tiles * 8 * 128 * 4)

    partials = pl.pallas_call(
        kernel,
        out_shape=jax.ShapeDtypeStruct((num_tiles, 8, 128), jnp.float32),
        grid_spec=pltpu.PrefetchScalarGridSpec(
            num_scalar_prefetch=0,
            grid=(num_tiles,),
            in_specs=[pl.BlockSpec((C, tile_b, S), lambda i: (0, i, 0))],
            out_specs=pl.BlockSpec((1, 8, 128), lambda i: (i, 0, 0)),
        ),
        compiler_params=pltpu.CompilerParams(
            dimension_semantics=("parallel",),
            vmem_limit_bytes=vmem_limit),
        cost_estimate=cost,
    )(x_cbs)

    total = jnp.sum(partials[:, 0, 0])
    # Both loss terms normalize by the same (S - 1) * B.
    return total / (float(S - 1) * float(B))


def temporal_continuity_loss(logits, targets=None, *,
                             lambda_smooth=0.3, lambda_trans=0.3):
    """Matches TemporalContinuityLoss(lambda_smooth, lambda_trans)(logits, targets).

    logits: [batch, seq_len, num_classes == 5]; `targets` is unused by the
    original forward and accepted only for signature parity.
    """
    del targets  # unused by the PyTorch forward
    logits = jnp.asarray(logits)
    B, S, C = logits.shape
    if C != _NUM_CLASSES:
        raise ValueError(f"num_classes must be {_NUM_CLASSES}, got {C}")
    if S <= 1:
        return jnp.float32(0.0)
    tile_b = _choose_tile_b(B, S, C, logits.dtype.itemsize)
    return _tcl_pallas(logits, tile_b=int(tile_b),
                       lambda_smooth=float(lambda_smooth),
                       lambda_trans=float(lambda_trans))


def _reference(logits, trans, lambda_smooth=0.3, lambda_trans=0.3):
    """Pure-JAX reference mirroring the PyTorch forward."""
    x = jnp.asarray(logits, jnp.float32)
    B, S, C = x.shape
    if S <= 1:
        return jnp.float32(0.0)
    probs = jax.nn.softmax(x, axis=-1)
    prev, curr = probs[:, :-1, :], probs[:, 1:, :]
    smooth = jnp.sum(jnp.mean(jnp.sum(jnp.abs(prev - curr), axis=-1), axis=0))
    smooth = smooth / (S - 1)
    expected = jnp.einsum("btc,cd->btd", prev, trans)
    kl_el = jnp.where(
        expected > 0.0,
        expected * (jnp.log(jnp.where(expected > 0.0, expected, 1.0))
                    - jnp.log(curr)),
        0.0)
    trans_loss = jnp.sum(kl_el) / (B * (S - 1))
    return lambda_smooth * smooth + lambda_trans * trans_loss


if __name__ == "__main__":
    key = jax.random.PRNGKey(0)

    # Shapes implied by the module: [batch, seq_len, num_classes=5].
    B, S, C = 2, 8, 5
    logits = jax.random.normal(key, (B, S, C), dtype=jnp.float32)
    loss = temporal_continuity_loss(logits)
    jax.block_until_ready(loss)
    ref = _reference(logits, SLEEP_STAGE_TRANSITIONS)
    assert jnp.allclose(loss, ref, rtol=1e-5, atol=1e-5), (loss, ref)

    # Ragged multi-tile path (batch masking + "parallel" per-tile partial sums).
    B2, S2 = 12, 16
    logits2 = jax.random.normal(jax.random.PRNGKey(0), (B2, S2, C),
                                dtype=jnp.float32)
    loss2 = temporal_continuity_loss(logits2, lambda_smooth=0.5, lambda_trans=0.25)
    jax.block_until_ready(loss2)
    ref2 = _reference(logits2, SLEEP_STAGE_TRANSITIONS, 0.5, 0.25)
    assert jnp.allclose(loss2, ref2, rtol=1e-5, atol=1e-5), (loss2, ref2)

    print("KERNEL_OK")
</pallas_src>

<mosaic_0001>
module attributes {stable_mosaic.version = 11 : i64} {
  func.func @_tcl_kernel(%arg0: i32, %arg1: memref<5x2x8xf32, #tpu.memory_space<vmem>>, %arg2: memref<1x8x128xf32, #tpu.memory_space<vmem>>) attributes {dimension_semantics = [#tpu.dimension_semantics<parallel>], iteration_bounds = array<i64: 1>, scalar_prefetch = 0 : i64, scratch_operands = 0 : i64, tpu.core_type = #tpu.core_type<tc>, window_params = [{transform_indices = @transform_0, window_bounds = array<i64: 5, 2, 8>}, {transform_indices = @transform_1, window_bounds = array<i64: 1, 8, 128>}]} {
    %c0 = arith.constant 0 : index
    %c0_0 = arith.constant 0 : index
    %c0_1 = arith.constant 0 : index
    %0 = vector.load %arg1[%c0, %c0_0, %c0_1] : memref<5x2x8xf32, #tpu.memory_space<vmem>>, vector<1x2x8xf32>
    %1 = vector.shape_cast %0 : vector<1x2x8xf32> to vector<2x8xf32>
    %c1 = arith.constant 1 : index
    %c0_2 = arith.constant 0 : index
    %c0_3 = arith.constant 0 : index
    %2 = vector.load %arg1[%c1, %c0_2, %c0_3] : memref<5x2x8xf32, #tpu.memory_space<vmem>>, vector<1x2x8xf32>
    %3 = vector.shape_cast %2 : vector<1x2x8xf32> to vector<2x8xf32>
    %c2 = arith.constant 2 : index
    %c0_4 = arith.constant 0 : index
    %c0_5 = arith.constant 0 : index
    %4 = vector.load %arg1[%c2, %c0_4, %c0_5] : memref<5x2x8xf32, #tpu.memory_space<vmem>>, vector<1x2x8xf32>
    %5 = vector.shape_cast %4 : vector<1x2x8xf32> to vector<2x8xf32>
    %c3 = arith.constant 3 : index
    %c0_6 = arith.constant 0 : index
    %c0_7 = arith.constant 0 : index
    %6 = vector.load %arg1[%c3, %c0_6, %c0_7] : memref<5x2x8xf32, #tpu.memory_space<vmem>>, vector<1x2x8xf32>
    %7 = vector.shape_cast %6 : vector<1x2x8xf32> to vector<2x8xf32>
    %c4 = arith.constant 4 : index
    %c0_8 = arith.constant 0 : index
    %c0_9 = arith.constant 0 : index
    %8 = vector.load %arg1[%c4, %c0_8, %c0_9] : memref<5x2x8xf32, #tpu.memory_space<vmem>>, vector<1x2x8xf32>
    %9 = vector.shape_cast %8 : vector<1x2x8xf32> to vector<2x8xf32>
    %10 = arith.maximumf %1, %3 : vector<2x8xf32>
    %11 = arith.maximumf %10, %5 : vector<2x8xf32>
    %12 = arith.maximumf %11, %7 : vector<2x8xf32>
    %13 = arith.maximumf %12, %9 : vector<2x8xf32>
    %14 = arith.subf %1, %13 : vector<2x8xf32>
    %15 = arith.subf %3, %13 : vector<2x8xf32>
    %16 = arith.subf %5, %13 : vector<2x8xf32>
    %17 = arith.subf %7, %13 : vector<2x8xf32>
    %18 = arith.subf %9, %13 : vector<2x8xf32>
    %19 = math.exp %14 : vector<2x8xf32>
    %20 = math.exp %15 : vector<2x8xf32>
    %21 = math.exp %16 : vector<2x8xf32>
    %22 = math.exp %17 : vector<2x8xf32>
    %23 = math.exp %18 : vector<2x8xf32>
    %24 = arith.addf %19, %20 : vector<2x8xf32>
    %25 = arith.addf %24, %21 : vector<2x8xf32>
    %26 = arith.addf %25, %22 : vector<2x8xf32>
    %27 = arith.addf %26, %23 : vector<2x8xf32>
    %28 = tpu.reciprocal %27 : vector<2x8xf32> -> vector<2x8xf32>
    %29 = math.log %27 : vector<2x8xf32>
    %30 = arith.mulf %19, %28 : vector<2x8xf32>
    %31 = arith.mulf %20, %28 : vector<2x8xf32>
    %32 = arith.mulf %21, %28 : vector<2x8xf32>
    %33 = arith.mulf %22, %28 : vector<2x8xf32>
    %34 = arith.mulf %23, %28 : vector<2x8xf32>
    %35 = arith.subf %14, %29 : vector<2x8xf32>
    %36 = arith.subf %15, %29 : vector<2x8xf32>
    %37 = arith.subf %16, %29 : vector<2x8xf32>
    %38 = arith.subf %17, %29 : vector<2x8xf32>
    %39 = arith.subf %18, %29 : vector<2x8xf32>
    %40 = vector.extract_strided_slice %30 {offsets = [0, 0], sizes = [2, 7], strides = [1, 1]} : vector<2x8xf32> to vector<2x7xf32>
    %41 = vector.extract_strided_slice %31 {offsets = [0, 0], sizes = [2, 7], strides = [1, 1]} : vector<2x8xf32> to vector<2x7xf32>
    %42 = vector.extract_strided_slice %32 {offsets = [0, 0], sizes = [2, 7], strides = [1, 1]} : vector<2x8xf32> to vector<2x7xf32>
    %43 = vector.extract_strided_slice %33 {offsets = [0, 0], sizes = [2, 7], strides = [1, 1]} : vector<2x8xf32> to vector<2x7xf32>
    %44 = vector.extract_strided_slice %34 {offsets = [0, 0], sizes = [2, 7], strides = [1, 1]} : vector<2x8xf32> to vector<2x7xf32>
    %45 = vector.extract_strided_slice %35 {offsets = [0, 1], sizes = [2, 7], strides = [1, 1]} : vector<2x8xf32> to vector<2x7xf32>
    %46 = vector.extract_strided_slice %36 {offsets = [0, 1], sizes = [2, 7], strides = [1, 1]} : vector<2x8xf32> to vector<2x7xf32>
    %47 = vector.extract_strided_slice %37 {offsets = [0, 1], sizes = [2, 7], strides = [1, 1]} : vector<2x8xf32> to vector<2x7xf32>
    %48 = vector.extract_strided_slice %38 {offsets = [0, 1], sizes = [2, 7], strides = [1, 1]} : vector<2x8xf32> to vector<2x7xf32>
    %49 = vector.extract_strided_slice %39 {offsets = [0, 1], sizes = [2, 7], strides = [1, 1]} : vector<2x8xf32> to vector<2x7xf32>
    %50 = vector.extract_strided_slice %30 {offsets = [0, 1], sizes = [2, 7], strides = [1, 1]} : vector<2x8xf32> to vector<2x7xf32>
    %51 = arith.subf %40, %50 : vector<2x7xf32>
    %52 = math.absf %51 : vector<2x7xf32>
    %cst = arith.constant 3.000000e-01 : f32
    %53 = vector.broadcast %cst : f32 to vector<2x7xf32>
    %54 = arith.mulf %53, %52 : vector<2x7xf32>
    %cst_10 = arith.constant 8.000000e-01 : f32
    %55 = vector.broadcast %cst_10 : f32 to vector<2x7xf32>
    %56 = arith.mulf %55, %40 : vector<2x7xf32>
    %cst_11 = arith.constant 1.000000e-01 : f32
    %57 = vector.broadcast %cst_11 : f32 to vector<2x7xf32>
    %58 = arith.mulf %57, %41 : vector<2x7xf32>
    %59 = arith.addf %56, %58 : vector<2x7xf32>
    %cst_12 = arith.constant 1.000000e-01 : f32
    %60 = vector.broadcast %cst_12 : f32 to vector<2x7xf32>
    %61 = arith.mulf %60, %44 : vector<2x7xf32>
    %62 = arith.addf %59, %61 : vector<2x7xf32>
    %63 = math.log %62 : vector<2x7xf32>
    %64 = arith.subf %63, %45 : vector<2x7xf32>
    %65 = arith.mulf %62, %64 : vector<2x7xf32>
    %cst_13 = arith.constant 3.000000e-01 : f32
    %66 = vector.broadcast %cst_13 : f32 to vector<2x7xf32>
    %67 = arith.mulf %66, %65 : vector<2x7xf32>
    %68 = arith.addf %54, %67 : vector<2x7xf32>
    %69 = vector.extract_strided_slice %31 {offsets = [0, 1], sizes = [2, 7], strides = [1, 1]} : vector<2x8xf32> to vector<2x7xf32>
    %70 = arith.subf %41, %69 : vector<2x7xf32>
    %71 = math.absf %70 : vector<2x7xf32>
    %cst_14 = arith.constant 3.000000e-01 : f32
    %72 = vector.broadcast %cst_14 : f32 to vector<2x7xf32>
    %73 = arith.mulf %72, %71 : vector<2x7xf32>
    %cst_15 = arith.constant 2.000000e-01 : f32
    %74 = vector.broadcast %cst_15 : f32 to vector<2x7xf32>
    %75 = arith.mulf %74, %40 : vector<2x7xf32>
    %cst_16 = arith.constant 4.000000e-01 : f32
    %76 = vector.broadcast %cst_16 : f32 to vector<2x7xf32>
    %77 = arith.mulf %76, %41 : vector<2x7xf32>
    %78 = arith.addf %75, %77 : vector<2x7xf32>
    %cst_17 = arith.constant 1.000000e-01 : f32
    %79 = vector.broadcast %cst_17 : f32 to vector<2x7xf32>
    %80 = arith.mulf %79, %42 : vector<2x7xf32>
    %81 = arith.addf %78, %80 : vector<2x7xf32>
    %cst_18 = arith.constant 2.000000e-01 : f32
    %82 = vector.broadcast %cst_18 : f32 to vector<2x7xf32>
    %83 = arith.mulf %82, %44 : vector<2x7xf32>
    %84 = arith.addf %81, %83 : vector<2x7xf32>
    %85 = math.log %84 : vector<2x7xf32>
    %86 = arith.subf %85, %46 : vector<2x7xf32>
    %87 = arith.mulf %84, %86 : vector<2x7xf32>
    %cst_19 = arith.constant 3.000000e-01 : f32
    %88 = vector.broadcast %cst_19 : f32 to vector<2x7xf32>
    %89 = arith.mulf %88, %87 : vector<2x7xf32>
    %90 = arith.addf %73, %89 : vector<2x7xf32>
    %91 = arith.addf %68, %90 : vector<2x7xf32>
    %92 = vector.extract_strided_slice %32 {offsets = [0, 1], sizes = [2, 7], strides = [1, 1]} : vector<2x8xf32> to vector<2x7xf32>
    %93 = arith.subf %42, %92 : vector<2x7xf32>
    %94 = math.absf %93 : vector<2x7xf32>
    %cst_20 = arith.constant 3.000000e-01 : f32
    %95 = vector.broadcast %cst_20 : f32 to vector<2x7xf32>
    %96 = arith.mulf %95, %94 : vector<2x7xf32>
    %cst_21 = arith.constant 4.000000e-01 : f32
    %97 = vector.broadcast %cst_21 : f32 to vector<2x7xf32>
    %98 = arith.mulf %97, %41 : vector<2x7xf32>
    %cst_22 = arith.constant 0.699999988 : f32
    %99 = vector.broadcast %cst_22 : f32 to vector<2x7xf32>
    %100 = arith.mulf %99, %42 : vector<2x7xf32>
    %101 = arith.addf %98, %100 : vector<2x7xf32>
    %cst_23 = arith.constant 3.000000e-01 : f32
    %102 = vector.broadcast %cst_23 : f32 to vector<2x7xf32>
    %103 = arith.mulf %102, %43 : vector<2x7xf32>
    %104 = arith.addf %101, %103 : vector<2x7xf32>
    %105 = math.log %104 : vector<2x7xf32>
    %106 = arith.subf %105, %47 : vector<2x7xf32>
    %107 = arith.mulf %104, %106 : vector<2x7xf32>
    %cst_24 = arith.constant 3.000000e-01 : f32
    %108 = vector.broadcast %cst_24 : f32 to vector<2x7xf32>
    %109 = arith.mulf %108, %107 : vector<2x7xf32>
    %110 = arith.addf %96, %109 : vector<2x7xf32>
    %111 = arith.addf %91, %110 : vector<2x7xf32>
    %112 = vector.extract_strided_slice %33 {offsets = [0, 1], sizes = [2, 7], strides = [1, 1]} : vector<2x8xf32> to vector<2x7xf32>
    %113 = arith.subf %43, %112 : vector<2x7xf32>
    %114 = math.absf %113 : vector<2x7xf32>
    %cst_25 = arith.constant 3.000000e-01 : f32
    %115 = vector.broadcast %cst_25 : f32 to vector<2x7xf32>
    %116 = arith.mulf %115, %114 : vector<2x7xf32>
    %cst_26 = arith.constant 2.000000e-01 : f32
    %117 = vector.broadcast %cst_26 : f32 to vector<2x7xf32>
    %118 = arith.mulf %117, %42 : vector<2x7xf32>
    %cst_27 = arith.constant 0.699999988 : f32
    %119 = vector.broadcast %cst_27 : f32 to vector<2x7xf32>
    %120 = arith.mulf %119, %43 : vector<2x7xf32>
    %121 = arith.addf %118, %120 : vector<2x7xf32>
    %122 = math.log %121 : vector<2x7xf32>
    %123 = arith.subf %122, %48 : vector<2x7xf32>
    %124 = arith.mulf %121, %123 : vector<2x7xf32>
    %cst_28 = arith.constant 3.000000e-01 : f32
    %125 = vector.broadcast %cst_28 : f32 to vector<2x7xf32>
    %126 = arith.mulf %125, %124 : vector<2x7xf32>
    %127 = arith.addf %116, %126 : vector<2x7xf32>
    %128 = arith.addf %111, %127 : vector<2x7xf32>
    %129 = vector.extract_strided_slice %34 {offsets = [0, 1], sizes = [2, 7], strides = [1, 1]} : vector<2x8xf32> to vector<2x7xf32>
    %130 = arith.subf %44, %129 : vector<2x7xf32>
    %131 = math.absf %130 : vector<2x7xf32>
    %cst_29 = arith.constant 3.000000e-01 : f32
    %132 = vector.broadcast %cst_29 : f32 to vector<2x7xf32>
    %133 = arith.mulf %132, %131 : vector<2x7xf32>
    %cst_30 = arith.constant 1.000000e-01 : f32
    %134 = vector.broadcast %cst_30 : f32 to vector<2x7xf32>
    %135 = arith.mulf %134, %41 : vector<2x7xf32>
    %cst_31 = arith.constant 0.699999988 : f32
    %136 = vector.broadcast %cst_31 : f32 to vector<2x7xf32>
    %137 = arith.mulf %136, %44 : vector<2x7xf32>
    %138 = arith.addf %135, %137 : vector<2x7xf32>
    %139 = math.log %138 : vector<2x7xf32>
    %140 = arith.subf %139, %49 : vector<2x7xf32>
    %141 = arith.mulf %138, %140 : vector<2x7xf32>
    %cst_32 = arith.constant 3.000000e-01 : f32
    %142 = vector.broadcast %cst_32 : f32 to vector<2x7xf32>
    %143 = arith.mulf %142, %141 : vector<2x7xf32>
    %144 = arith.addf %133, %143 : vector<2x7xf32>
    %145 = arith.addf %128, %144 : vector<2x7xf32>
    %146 = tpu.iota {dimensions = array<i32: 0>} : vector<2x7xi32>
    %c2_i32 = arith.constant 2 : i32
    %147 = arith.muli %arg0, %c2_i32 : i32
    %148 = vector.broadcast %147 : i32 to vector<2x7xi32>
    %149 = arith.addi %146, %148 : vector<2x7xi32>
    %c2_i32_33 = arith.constant 2 : i32
    %150 = vector.broadcast %c2_i32_33 : i32 to vector<2x7xi32>
    %151 = arith.cmpi slt, %149, %150 : vector<2x7xi32>
    %cst_34 = arith.constant 0.000000e+00 : f32
    %152 = vector.broadcast %cst_34 : f32 to vector<2x7xf32>
    %153 = arith.select %151, %145, %152 : vector<2x7xi1>, vector<2x7xf32>
    %154 = vector.shape_cast %153 : vector<2x7xf32> to vector<1x2x7xf32>
    %cst_35 = arith.constant dense<0.000000e+00> : vector<1xf32>
    %155 = vector.multi_reduction <add>, %154, %cst_35 [1, 2] : vector<1x2x7xf32> to vector<1xf32>
    %156 = vector.shape_cast %155 : vector<1xf32> to vector<1x1x1xf32>
    %157 = vector.extract %156[0, 0, 0] : f32 from vector<1x1x1xf32>
    %158 = vector.broadcast %157 : f32 to vector<1x8x128xf32>
    %c0_36 = arith.constant 0 : index
    %c0_37 = arith.constant 0 : index
    %c0_38 = arith.constant 0 : index
    %159 = vector.load %arg2[%c0_36, %c0_37, %c0_38] : memref<1x8x128xf32, #tpu.memory_space<vmem>>, vector<1x8x128xf32>
    tpu.vector_store %arg2[%c0_36, %c0_37, %c0_38], %158 {strides = array<i32>} : memref<1x8x128xf32, #tpu.memory_space<vmem>>, vector<1x8x128xf32>,
    return
  }
  func.func @transform_0(%arg0: i32) -> (i32, i32, i32) {
    %c0_i32 = arith.constant 0 : i32
    %c0_i32_0 = arith.constant 0 : i32
    %c0_i32_1 = arith.constant 0 : i32
    return %c0_i32, %arg0, %c0_i32_0 : i32, i32, i32
  }
  func.func @transform_1(%arg0: i32) -> (i32, i32, i32) {
    %c0_i32 = arith.constant 0 : i32
    %c0_i32_0 = arith.constant 0 : i32
    %c0_i32_1 = arith.constant 0 : i32
    return %arg0, %c0_i32, %c0_i32_0 : i32, i32, i32
  }
}

</mosaic_0001>

<llo_original>
// kernel: _tcl_pallas.1
$region0: #{_tcl_pallas.1}
  #allocation0 [shape = 'u32[]', space=smem, size = 0x4, offset = 0x4, fixed_abs, tag = 'smem constant byte address 0x4 - core index']
  #allocation1 [shape = 'u32[144,128]{1,0:T(1,128)}', space=vmem, size = 0x12000, scoped, tag = 'internal scratch']
  %s0 = inlined_call_operand.hbm [shape: f32[5,2,8], index: 0, kind: input, shape index: {}]
  %s1 = inlined_call_operand.vmem [shape: f32[1,8,128], index: 1, kind: output, shape index: {}]
  %s2 = sld [smem:[#allocation0]]
  $region18: #{_tcl_pallas.1} parent=0
    _
  %s4 = ssub.s32 1, %s2
  %s5 = scalar_select 0, %s4, %s2
  $region1: #{_tcl_pallas.1} parent=0
    #allocation2 [shape = 'u8[5120]{0}', space=vmem, size = 0x1400, scoped, tag = 'input window, operand 0, single buffered']
    #allocation3 [shape = 's32[1]{0}', space=sflag, size = 0x4, scoped, tag = 'scoped memory for _tcl_pallas.1']
    %6 = vsyncpa [#allocation3], 0
    // Predicated region
    $region2: #{_tcl_pallas.1} parent=1 // pred_check
      _
    $region3: #{_tcl_pallas.1} parent=1 // pred_check_branch
      %8 = sbr.rel (0) target = $region5
    $region4: #{_tcl_pallas.1} parent=1 // pred_region
      %s10 = ssub.s32 160, 160
      %11 = vsyncadd [#allocation3], %s10
      %s12 = sshll.u32 [#allocation2], 4
      %s13 = int_to_ptr.vmem [resolvable:$true] %s12
      %18 = dma.hbm_to_vmem [thread:$0]  %s0, 160, %s13, [#allocation3], 32, 32, 2
    $region5: #{_tcl_pallas.1} parent=1 // pred_fallthru
      _
    // Predicated region
    $region6: #{_tcl_pallas.1} parent=1 // pred_check
      _
    $region7: #{_tcl_pallas.1} parent=1 // pred_check_branch
      %20 = sbr.rel (0) target = $region9
    $region8: #{_tcl_pallas.1} parent=1 // pred_region
      %21 = dma.done [#allocation3], 160
    $region9: #{_tcl_pallas.1} parent=1 // pred_fallthru
      _
    %v22 = vld [vmem:[#allocation2] sm:$0x3]
    %s23 = scalar_lea.vmem [#allocation2], 2
    %v24 = vld [vmem:[%s23] sm:$0x3]
    %s25 = scalar_lea.vmem [#allocation2], 4
    %v26 = vld [vmem:[%s25] sm:$0x3]
    %s27 = scalar_lea.vmem [#allocation2], 6
    %v28 = vld [vmem:[%s27] sm:$0x3]
    %s29 = scalar_lea.vmem [#allocation2], 8
    %v30 = vld [vmem:[%s29] sm:$0x3]
    %v31 = vmax.f32 %v22, %v24
    %v32 = vmax.f32 %v31, %v26
    %v33 = vmax.f32 %v32, %v28
    %v34 = vmax.f32 %v33, %v30
    %v35 = vsub.f32 %v22, %v34
    %v36 = vsub.f32 %v24, %v34
    %v37 = vsub.f32 %v26, %v34
    %v38 = vsub.f32 %v28, %v34
    %v39 = vsub.f32 %v30, %v34
    %v40 = vmul.f32 %v35, 1.442695
    %v41 = vpow.pop %v40
    %v42 = vmul.f32 %v36, 1.442695
    %v43 = vpow.pop %v42
    %v44 = vmul.f32 %v37, 1.442695
    %v45 = vpow.pop %v44
    %v46 = vmul.f32 %v38, 1.442695
    %v47 = vpow.pop %v46
    %v48 = vmul.f32 %v39, 1.442695
    %v49 = vpow.pop %v48
    %v50 = vadd.f32 %v41, %v43
    %v51 = vadd.f32 %v50, %v45
    %v52 = vadd.f32 %v51, %v47
    %v53 = vadd.f32 %v52, %v49
    %v54 = vrcp.pop %v53
    %v55 = vlog2.pop %v53
    %v56 = vmul.f32 %v55, 0.6931472
    %v57 = vmul.f32 %v41, %v54
    %v58 = vmul.f32 %v43, %v54
    %v59 = vmul.f32 %v45, %v54
    %v60 = vmul.f32 %v47, %v54
    %v61 = vmul.f32 %v49, %v54
    %v62 = vsub.f32 %v35, %v56
    %v63 = vsub.f32 %v36, %v56
    %v64 = vsub.f32 %v37, %v56
    %v65 = vsub.f32 %v38, %v56
    %v66 = vsub.f32 %v39, %v56
    %68 = vrot.lane.b32.xlu0 %v57, 127
    %v69 = vpop.permute.xlu0 %68
    %v71 = vsub.f32 %v57, %v69
    %v72 = vand.u32 2147483647, %v71
    %v73 = vmul.f32 %v72, 0.3
    %v74 = vmul.f32 %v57, 0.8
    %v75 = vmul.f32 %v58, 0.1
    %v76 = vadd.f32 %v74, %v75
    %v77 = vmul.f32 %v61, 0.1
    %v78 = vadd.f32 %v76, %v77
    %v79 = vlog2.pop %v78
    %v80 = vmul.f32 %v79, 0.6931472
    %82 = vrot.lane.b32.xlu0 %v62, 127
    %v83 = vpop.permute.xlu0 %82
    %v85 = vsub.f32 %v80, %v83
    %v86 = vmul.f32 %v78, %v85
    %v87 = vmul.f32 %v86, 0.3
    %v88 = vadd.f32 %v73, %v87
    %90 = vrot.lane.b32.xlu0 %v58, 127
    %v91 = vpop.permute.xlu0 %90
    %v93 = vsub.f32 %v58, %v91
    %v94 = vand.u32 2147483647, %v93
    %v95 = vmul.f32 %v94, 0.3
    %v96 = vmul.f32 %v57, 0.2
    %v97 = vmul.f32 %v58, 0.4
    %v98 = vadd.f32 %v96, %v97
    %v99 = vmul.f32 %v59, 0.1
    %v100 = vadd.f32 %v98, %v99
    %v101 = vmul.f32 %v61, 0.2
    %v102 = vadd.f32 %v100, %v101
    %v103 = vlog2.pop %v102
    %v104 = vmul.f32 %v103, 0.6931472
    %106 = vrot.lane.b32.xlu0 %v63, 127
    %v107 = vpop.permute.xlu0 %106
    %v109 = vsub.f32 %v104, %v107
    %v110 = vmul.f32 %v102, %v109
    %v111 = vmul.f32 %v110, 0.3
    %v112 = vadd.f32 %v95, %v111
    %v113 = vadd.f32 %v88, %v112
    %115 = vrot.lane.b32.xlu0 %v59, 127
    %v116 = vpop.permute.xlu0 %115
    %v118 = vsub.f32 %v59, %v116
    %v119 = vand.u32 2147483647, %v118
    %v120 = vmul.f32 %v119, 0.3
    %v121 = vmul.f32 %v59, 0.7
    %v122 = vadd.f32 %v97, %v121
    %v123 = vmul.f32 %v60, 0.3
    %v124 = vadd.f32 %v122, %v123
    %v125 = vlog2.pop %v124
    %v126 = vmul.f32 %v125, 0.6931472
    %128 = vrot.lane.b32.xlu0 %v64, 127
    %v129 = vpop.permute.xlu0 %128
    %v131 = vsub.f32 %v126, %v129
    %v132 = vmul.f32 %v124, %v131
    %v133 = vmul.f32 %v132, 0.3
    %v134 = vadd.f32 %v120, %v133
    %v135 = vadd.f32 %v113, %v134
    %137 = vrot.lane.b32.xlu0 %v60, 127
    %v138 = vpop.permute.xlu0 %137
    %v140 = vsub.f32 %v60, %v138
    %v141 = vand.u32 2147483647, %v140
    %v142 = vmul.f32 %v141, 0.3
    %v143 = vmul.f32 %v59, 0.2
    %v144 = vmul.f32 %v60, 0.7
    %v145 = vadd.f32 %v143, %v144
    %v146 = vlog2.pop %v145
    %v147 = vmul.f32 %v146, 0.6931472
    %149 = vrot.lane.b32.xlu0 %v65, 127
    %v150 = vpop.permute.xlu0 %149
    %v152 = vsub.f32 %v147, %v150
    %v153 = vmul.f32 %v145, %v152
    %v154 = vmul.f32 %v153, 0.3
    %v155 = vadd.f32 %v142, %v154
    %v156 = vadd.f32 %v135, %v155
    %158 = vrot.lane.b32.xlu0 %v61, 127
    %v159 = vpop.permute.xlu0 %158
    %v161 = vsub.f32 %v61, %v159
    %v162 = vand.u32 2147483647, %v161
    %v163 = vmul.f32 %v162, 0.3
    %v164 = vmul.f32 %v61, 0.7
    %v165 = vadd.f32 %v75, %v164
    %v166 = vlog2.pop %v165
    %v167 = vmul.f32 %v166, 0.6931472
    %169 = vrot.lane.b32.xlu0 %v66, 127
    %v170 = vpop.permute.xlu0 %169
    %v172 = vsub.f32 %v167, %v170
    %v173 = vmul.f32 %v165, %v172
    %v174 = vmul.f32 %v173, 0.3
    %v175 = vadd.f32 %v163, %v174
    %v176 = vadd.f32 %v156, %v175
    %v177 = vlaneseq
    %v178 = vshrl.u32 %v177, 7
    %s179 = smul.u32 0, 2
    %v180 = vstv %s179
    %v181 = vadd.s32 %v178, %v180
    %vm182 = vcmp.lt.s32.totalorder %v181, 2
    %v183 = vsel %vm182, %v176, 0.0
    %vm184 = vcmask 50176
    %v185 = vsel %vm184, %v183, 0.0
    %186 = vadd.xlane.f32.xlu0 %v185
    %v187 = vpop.xlane.xlu0 %186
    %v188 = vrot.slane %v187, 4
    %v189 = vadd.f32 %v187, %v188
    %v190 = vrot.slane %v189, 2
    %v191 = vadd.f32 %v189, %v190
    %v192 = vrot.slane %v191, 1
    %v193 = vadd.f32 %v191, %v192
    %s194 = vtos %v193
    %v195 = vstv %s194
    %196 = vst [vmem:[%s1] sm:$0xff] %v195
    // Predicated region
    $region10: #{_tcl_pallas.1} parent=1 // pred_check
      _
    $region11: #{_tcl_pallas.1} parent=1 // pred_check_branch
      %198 = sbr.rel (0) target = $region13
    $region12: #{_tcl_pallas.1} parent=1 // pred_region
      _
    $region13: #{_tcl_pallas.1} parent=1 // pred_fallthru
      _
    // Predicated region
    $region14: #{_tcl_pallas.1} parent=1 // pred_check
      _
    $region15: #{_tcl_pallas.1} parent=1 // pred_check_branch
      %200 = sbr.rel (0) target = $region17
    $region16: #{_tcl_pallas.1} parent=1 // pred_region
      _
    $region17: #{_tcl_pallas.1} parent=1 // pred_fallthru
      _
    %201 = vsyncpa [#allocation3], 1

</llo_original>
